<compile_context>
chip_gen: v5e
topology: v5e:2x2
jax: 0.10.0
libtpu: 0.0.40
codegen_flags: <defaults>
</compile_context>

<pallas_src>
import jax
import jax.numpy as jnp
from jax.experimental import pallas as pl
from jax.experimental.pallas import tpu as pltpu


# ----------------------------------------------------------------------------- kernel

def mlp11_kernel(m1_ref, m2_ref, m3_ref, m4_ref,
                 w1_ref, b1_ref, w2_ref, b2_ref,
                 wt1_ref, bt1_ref, wt2_ref, bt2_ref,
                 out_ref):
    cdt = w1_ref.dtype            # MXU operand dtype (f32 or bf16)
    f32 = jnp.float32
    d_in = w1_ref.shape[0] // 4   # per-branch input width

    # First branch layer: concat(M1..M4) @ blockdiag(W1_1..4) WITHOUT materializing
    # the concat: h = sum_i M_i @ W1_bd[i*d_in:(i+1)*d_in, :] (other blocks are 0,
    # so the partial products contribute exact zeros -> bitwise-identical result).
    h = jnp.dot(m1_ref[...].astype(cdt), w1_ref[0 * d_in:1 * d_in, :],
                preferred_element_type=f32)
    h += jnp.dot(m2_ref[...].astype(cdt), w1_ref[1 * d_in:2 * d_in, :],
                 preferred_element_type=f32)
    h += jnp.dot(m3_ref[...].astype(cdt), w1_ref[2 * d_in:3 * d_in, :],
                 preferred_element_type=f32)
    h += jnp.dot(m4_ref[...].astype(cdt), w1_ref[3 * d_in:4 * d_in, :],
                 preferred_element_type=f32)
    h = jnp.maximum(h + b1_ref[...], 0.0).astype(cdt)      # (Bt, 128), cast fused

    m = jnp.dot(h, w2_ref[...], preferred_element_type=f32)
    m = jnp.maximum(m + b2_ref[...], 0.0).astype(cdt)      # (Bt, 128) == concat(m1..m4)

    t = jnp.dot(m, wt1_ref[...], preferred_element_type=f32)
    t = jnp.maximum(t + bt1_ref[...], 0.0).astype(cdt)     # (Bt, 64)

    o = jnp.dot(t, wt2_ref[...], preferred_element_type=f32)
    out_ref[...] = jnp.maximum(o + bt2_ref[...], 0.0)      # (Bt, 32) f32, lane-true


# ----------------------------------------------------------------------------- packing

def _round_up(n, m):
    return ((n + m - 1) // m) * m


def _block_diag(mats):
    rows = sum(m.shape[0] for m in mats)
    cols = sum(m.shape[1] for m in mats)
    out = jnp.zeros((rows, cols), mats[0].dtype)
    r = c = 0
    for m in mats:
        out = out.at[r:r + m.shape[0], c:c + m.shape[1]].set(m)
        r += m.shape[0]
        c += m.shape[1]
    return out


def pack_mlp11_params(branch_params, top_params, compute_dtype=jnp.float32):
    """One-time host-side packing.

    Branch weights -> block-diagonal (the whole branch stage is two wide matmuls).
    Top-layer weights are passed UNPADDED so the kernel never writes padded lanes
    to HBM.  Weights cast to `compute_dtype` (bf16 recommended, esp. on v5e);
    biases stay f32 (bias add / ReLU run on the f32 VPU path).
    """
    w1s, b1s, w2s, b2s = zip(*branch_params)
    w1_bd = _block_diag(list(w1s))                      # (4*d_in, 4*d_hidden)
    b1 = jnp.concatenate(b1s, axis=-1)                  # (1, 4*d_hidden)
    w2_bd = _block_diag(list(w2s))                      # (4*d_hidden, 4*num_class)
    b2 = jnp.concatenate(b2s, axis=-1)                  # (1, 4*num_class)
    wt1, bt1, wt2, bt2 = top_params                     # (128,64) (1,64) (64,32) (1,32)

    cast = lambda w: w.astype(compute_dtype)
    return (cast(w1_bd), b1.astype(jnp.float32),
            cast(w2_bd), b2.astype(jnp.float32),
            cast(wt1), bt1.astype(jnp.float32),
            cast(wt2), bt2.astype(jnp.float32))


# ----------------------------------------------------------------------------- wrapper

def _auto_batch_tile(B):
    cands = (4096, 2048, 1024, 512, 256, 128, 64, 32, 16, 8)
    for t in cands:                  # exact divisor giving >= 2 grid steps (v7x: 2 TCs)
        if B % t == 0 and B // t >= 2:
            return t
    for t in cands:                  # no clean divisor: pad batch, still >= 2 steps
        if 2 * t <= B:
            return t
    return B                         # tiny batch: single full-array block


def mlp11_forward(m_inputs, packed, *, batch_tile=None):
    """m_inputs: 4 arrays (B, d_in). packed: output of pack_mlp11_params."""
    w1, b1, w2, b2, wt1, bt1, wt2, bt2 = packed
    cdt = w1.dtype
    num_class = wt2.shape[1]

    # bf16 weights => bf16 activations on the wire (halves input HBM reads); the
    # in-kernel .astype then becomes a no-op.  f32 weights => f32 inputs (exact).
    m_inputs = [x.astype(cdt) for x in m_inputs]
    B, d_in = m_inputs[0].shape
    assert all(x.shape == (B, d_in) for x in m_inputs)

    if batch_tile is None:
        batch_tile = _auto_batch_tile(B)
    if batch_tile >= B:
        batch_tile, B_pad = B, B          # single full-array block (always legal)
    else:
        assert batch_tile % 8 == 0, "batch_tile < batch must be a multiple of 8"
        B_pad = _round_up(B, batch_tile)  # pad instead of one giant VMEM-busting block
    if B_pad != B:
        m_inputs = [jnp.pad(x, ((0, B_pad - B), (0, 0))) for x in m_inputs]
    grid = (B_pad // batch_tile,)

    def _const(a):
        # Constant block index -> stays resident in VMEM across grid steps.
        return pl.BlockSpec(a.shape, lambda i: (0, 0))

    in_specs = [pl.BlockSpec((batch_tile, d_in), lambda i: (i, 0)) for _ in range(4)]
    in_specs += [_const(a) for a in (w1, b1, w2, b2, wt1, bt1, wt2, bt2)]
    out_spec = pl.BlockSpec((batch_tile, num_class), lambda i: (i, 0))

    # VMEM budget from the actual per-step footprint (covers v5e's 16 MiB default
    # scoped limit, stays well under v7x's 64 MiB physical).
    in_item = m_inputs[0].dtype.itemsize
    weight_bytes = sum(int(a.size) * a.dtype.itemsize
                       for a in (w1, b1, w2, b2, wt1, bt1, wt2, bt2))
    act_cols = int(w1.shape[1] + w2.shape[1] + wt1.shape[1] + num_class)
    est = (2 * 4 * batch_tile * d_in * in_item       # 4 inputs, double-buffered
           + 2 * batch_tile * num_class * 4          # output, double-buffered
           + batch_tile * act_cols * 4               # h/m/t/o f32 temporaries
           + 2 * weight_bytes)                       # resident weights
    vmem_limit = int(min(max(2 * est + (4 << 20), 32 << 20), 60 << 20))

    flops = 2 * B_pad * int(w1.size + w2.size + wt1.size + wt2.size)
    bytes_accessed = (4 * B_pad * d_in * in_item + B_pad * num_class * 4 + weight_bytes)

    out = pl.pallas_call(
        mlp11_kernel,
        out_shape=jax.ShapeDtypeStruct((B_pad, num_class), jnp.float32),
        grid=grid,
        in_specs=in_specs,
        out_specs=out_spec,
        compiler_params=pltpu.CompilerParams(
            dimension_semantics=("parallel",),
            vmem_limit_bytes=vmem_limit),
        cost_estimate=pl.CostEstimate(flops=int(flops), transcendentals=0,
                                      bytes_accessed=int(bytes_accessed)),
    )(*m_inputs, w1, b1, w2, b2, wt1, bt1, wt2, bt2)

    return out[:B] if B_pad != B else out


# ----------------------------------------------------------------------------- reference

def _linear_params(key, fan_in, fan_out):
    """PyTorch-style init: U(-1/sqrt(fan_in), 1/sqrt(fan_in)); weights stored (in, out)."""
    kw, kb = jax.random.split(key)
    bound = 1.0 / jnp.sqrt(fan_in)
    w = jax.random.uniform(kw, (fan_in, fan_out), jnp.float32, -bound, bound)
    b = jax.random.uniform(kb, (1, fan_out), jnp.float32, -bound, bound)
    return w, b


def _reference(m_inputs, branch_params, top_params):
    def mlp2(x, w1, b1, w2, b2):
        h = jnp.maximum(x @ w1 + b1, 0.0)
        return jnp.maximum(h @ w2 + b2, 0.0)

    outs = [mlp2(x.astype(jnp.float32), *p) for x, p in zip(m_inputs, branch_params)]
    cat = jnp.concatenate(outs, axis=-1)
    wt1, bt1, wt2, bt2 = top_params
    h = jnp.maximum(cat @ wt1 + bt1, 0.0)
    return jnp.maximum(h @ wt2 + bt2, 0.0)


# ----------------------------------------------------------------------------- demo

if __name__ == "__main__":
    key = jax.random.PRNGKey(0)

    batch = 32
    d_in = 16               # per-branch num_input
    d_hidden = 32           # per-branch num_hidden
    num_class = 32          # per-branch & top num_class (module default)
    top_hidden = 64         # MLP11 num_hidden
    top_in = 4 * num_class  # MLP11 num_input (= 128, matches the concat)

    keys = jax.random.split(key, 16)

    m_inputs = [jax.random.normal(keys[i], (batch, d_in), jnp.float32)
                for i in range(4)]

    branch_params = []
    for i in range(4):
        w1, b1 = _linear_params(keys[4 + 2 * i], d_in, d_hidden)
        w2, b2 = _linear_params(keys[5 + 2 * i], d_hidden, num_class)
        branch_params.append((w1, b1, w2, b2))

    wt1, bt1 = _linear_params(keys[12], top_in, top_hidden)
    wt2, bt2 = _linear_params(keys[13], top_hidden, num_class)
    top_params = (wt1, bt1, wt2, bt2)

    ref = _reference(m_inputs, branch_params, top_params)

    # f32 weights: exact-semantics check (tight tolerance).
    packed_f32 = pack_mlp11_params(branch_params, top_params, jnp.float32)
    out_f32 = jax.block_until_ready(mlp11_forward(m_inputs, packed_f32))
    assert out_f32.shape == (batch, num_class)
    assert jnp.allclose(out_f32, ref, atol=1e-5, rtol=1e-5), "f32 kernel mismatch vs reference"

    # bf16 weights/activations on the MXU (f32 accumulate): relaxed tolerance.
    packed_bf16 = pack_mlp11_params(branch_params, top_params, jnp.bfloat16)
    out_bf16 = jax.block_until_ready(mlp11_forward(m_inputs, packed_bf16))
    assert out_bf16.shape == (batch, num_class)
    assert jnp.allclose(out_bf16, ref, atol=5e-2, rtol=5e-2), "bf16 kernel mismatch vs reference"

    print("KERNEL_OK")
</pallas_src>

<mosaic_0001>
module attributes {stable_mosaic.version = 11 : i64} {
  func.func @mlp11_kernel(%arg0: i32, %arg1: memref<16x16xf32, #tpu.memory_space<vmem>>, %arg2: memref<16x16xf32, #tpu.memory_space<vmem>>, %arg3: memref<16x16xf32, #tpu.memory_space<vmem>>, %arg4: memref<16x16xf32, #tpu.memory_space<vmem>>, %arg5: memref<64x128xf32, #tpu.memory_space<vmem>>, %arg6: memref<1x128xf32, #tpu.memory_space<vmem>>, %arg7: memref<128x128xf32, #tpu.memory_space<vmem>>, %arg8: memref<1x128xf32, #tpu.memory_space<vmem>>, %arg9: memref<128x64xf32, #tpu.memory_space<vmem>>, %arg10: memref<1x64xf32, #tpu.memory_space<vmem>>, %arg11: memref<64x32xf32, #tpu.memory_space<vmem>>, %arg12: memref<1x32xf32, #tpu.memory_space<vmem>>, %arg13: memref<16x32xf32, #tpu.memory_space<vmem>>) attributes {dimension_semantics = [#tpu.dimension_semantics<parallel>], iteration_bounds = array<i64: 2>, scalar_prefetch = 0 : i64, scratch_operands = 0 : i64, tpu.core_type = #tpu.core_type<tc>, window_params = [{transform_indices = @transform_0, window_bounds = array<i64: 16, 16>}, {transform_indices = @transform_1, window_bounds = array<i64: 16, 16>}, {transform_indices = @transform_2, window_bounds = array<i64: 16, 16>}, {transform_indices = @transform_3, window_bounds = array<i64: 16, 16>}, {pipeline_mode = #tpu.pipeline_mode<synchronous>, transform_indices = @transform_4, window_bounds = array<i64: 64, 128>}, {pipeline_mode = #tpu.pipeline_mode<synchronous>, transform_indices = @transform_5, window_bounds = array<i64: 1, 128>}, {pipeline_mode = #tpu.pipeline_mode<synchronous>, transform_indices = @transform_6, window_bounds = array<i64: 128, 128>}, {pipeline_mode = #tpu.pipeline_mode<synchronous>, transform_indices = @transform_7, window_bounds = array<i64: 1, 128>}, {pipeline_mode = #tpu.pipeline_mode<synchronous>, transform_indices = @transform_8, window_bounds = array<i64: 128, 64>}, {pipeline_mode = #tpu.pipeline_mode<synchronous>, transform_indices = @transform_9, window_bounds = array<i64: 1, 64>}, {pipeline_mode = #tpu.pipeline_mode<synchronous>, transform_indices = @transform_10, window_bounds = array<i64: 64, 32>}, {pipeline_mode = #tpu.pipeline_mode<synchronous>, transform_indices = @transform_11, window_bounds = array<i64: 1, 32>}, {transform_indices = @transform_12, window_bounds = array<i64: 16, 32>}]} {
    %c0 = arith.constant 0 : index
    %c0_0 = arith.constant 0 : index
    %0 = vector.load %arg1[%c0, %c0_0] : memref<16x16xf32, #tpu.memory_space<vmem>>, vector<16x16xf32>
    %c0_1 = arith.constant 0 : index
    %c0_2 = arith.constant 0 : index
    %1 = vector.load %arg5[%c0_1, %c0_2] : memref<64x128xf32, #tpu.memory_space<vmem>>, vector<16x128xf32>
    %cst = arith.constant dense<0.000000e+00> : vector<16x128xf32>
    %2 = tpu.matmul %0, %1, %cst {dimension_numbers = #tpu.dot_dimension_numbers<[1], [0], [0], [1], [0, 0, 1, 1], [], []>} : vector<16x16xf32>, vector<16x128xf32>, vector<16x128xf32> -> vector<16x128xf32>
    %c0_3 = arith.constant 0 : index
    %c0_4 = arith.constant 0 : index
    %3 = vector.load %arg2[%c0_3, %c0_4] : memref<16x16xf32, #tpu.memory_space<vmem>>, vector<16x16xf32>
    %c16 = arith.constant 16 : index
    %c0_5 = arith.constant 0 : index
    %4 = vector.load %arg5[%c16, %c0_5] : memref<64x128xf32, #tpu.memory_space<vmem>>, vector<16x128xf32>
    %cst_6 = arith.constant dense<0.000000e+00> : vector<16x128xf32>
    %5 = tpu.matmul %3, %4, %cst_6 {dimension_numbers = #tpu.dot_dimension_numbers<[1], [0], [0], [1], [0, 0, 1, 1], [], []>} : vector<16x16xf32>, vector<16x128xf32>, vector<16x128xf32> -> vector<16x128xf32>
    %6 = arith.addf %2, %5 : vector<16x128xf32>
    %c0_7 = arith.constant 0 : index
    %c0_8 = arith.constant 0 : index
    %7 = vector.load %arg3[%c0_7, %c0_8] : memref<16x16xf32, #tpu.memory_space<vmem>>, vector<16x16xf32>
    %c32 = arith.constant 32 : index
    %c0_9 = arith.constant 0 : index
    %8 = vector.load %arg5[%c32, %c0_9] : memref<64x128xf32, #tpu.memory_space<vmem>>, vector<16x128xf32>
    %cst_10 = arith.constant dense<0.000000e+00> : vector<16x128xf32>
    %9 = tpu.matmul %7, %8, %cst_10 {dimension_numbers = #tpu.dot_dimension_numbers<[1], [0], [0], [1], [0, 0, 1, 1], [], []>} : vector<16x16xf32>, vector<16x128xf32>, vector<16x128xf32> -> vector<16x128xf32>
    %10 = arith.addf %6, %9 : vector<16x128xf32>
    %c0_11 = arith.constant 0 : index
    %c0_12 = arith.constant 0 : index
    %11 = vector.load %arg4[%c0_11, %c0_12] : memref<16x16xf32, #tpu.memory_space<vmem>>, vector<16x16xf32>
    %c48 = arith.constant 48 : index
    %c0_13 = arith.constant 0 : index
    %12 = vector.load %arg5[%c48, %c0_13] : memref<64x128xf32, #tpu.memory_space<vmem>>, vector<16x128xf32>
    %cst_14 = arith.constant dense<0.000000e+00> : vector<16x128xf32>
    %13 = tpu.matmul %11, %12, %cst_14 {dimension_numbers = #tpu.dot_dimension_numbers<[1], [0], [0], [1], [0, 0, 1, 1], [], []>} : vector<16x16xf32>, vector<16x128xf32>, vector<16x128xf32> -> vector<16x128xf32>
    %14 = arith.addf %10, %13 : vector<16x128xf32>
    %c0_15 = arith.constant 0 : index
    %c0_16 = arith.constant 0 : index
    %15 = vector.load %arg6[%c0_15, %c0_16] : memref<1x128xf32, #tpu.memory_space<vmem>>, vector<1x128xf32>
    %16 = vector.broadcast %15 : vector<1x128xf32> to vector<16x128xf32>
    %17 = arith.addf %14, %16 : vector<16x128xf32>
    %cst_17 = arith.constant 0.000000e+00 : f32
    %18 = vector.broadcast %cst_17 : f32 to vector<16x128xf32>
    %19 = arith.maximumf %17, %18 : vector<16x128xf32>
    %c0_18 = arith.constant 0 : index
    %c0_19 = arith.constant 0 : index
    %20 = vector.load %arg7[%c0_18, %c0_19] : memref<128x128xf32, #tpu.memory_space<vmem>>, vector<128x128xf32>
    %cst_20 = arith.constant dense<0.000000e+00> : vector<16x128xf32>
    %21 = tpu.matmul %19, %20, %cst_20 {dimension_numbers = #tpu.dot_dimension_numbers<[1], [0], [0], [1], [0, 0, 1, 1], [], []>} : vector<16x128xf32>, vector<128x128xf32>, vector<16x128xf32> -> vector<16x128xf32>
    %c0_21 = arith.constant 0 : index
    %c0_22 = arith.constant 0 : index
    %22 = vector.load %arg8[%c0_21, %c0_22] : memref<1x128xf32, #tpu.memory_space<vmem>>, vector<1x128xf32>
    %23 = vector.broadcast %22 : vector<1x128xf32> to vector<16x128xf32>
    %24 = arith.addf %21, %23 : vector<16x128xf32>
    %cst_23 = arith.constant 0.000000e+00 : f32
    %25 = vector.broadcast %cst_23 : f32 to vector<16x128xf32>
    %26 = arith.maximumf %24, %25 : vector<16x128xf32>
    %c0_24 = arith.constant 0 : index
    %c0_25 = arith.constant 0 : index
    %27 = vector.load %arg9[%c0_24, %c0_25] : memref<128x64xf32, #tpu.memory_space<vmem>>, vector<128x64xf32>
    %cst_26 = arith.constant dense<0.000000e+00> : vector<16x64xf32>
    %28 = tpu.matmul %26, %27, %cst_26 {dimension_numbers = #tpu.dot_dimension_numbers<[1], [0], [0], [1], [0, 0, 1, 1], [], []>} : vector<16x128xf32>, vector<128x64xf32>, vector<16x64xf32> -> vector<16x64xf32>
    %c0_27 = arith.constant 0 : index
    %c0_28 = arith.constant 0 : index
    %29 = vector.load %arg10[%c0_27, %c0_28] : memref<1x64xf32, #tpu.memory_space<vmem>>, vector<1x64xf32>
    %30 = vector.broadcast %29 : vector<1x64xf32> to vector<16x64xf32>
    %31 = arith.addf %28, %30 : vector<16x64xf32>
    %cst_29 = arith.constant 0.000000e+00 : f32
    %32 = vector.broadcast %cst_29 : f32 to vector<16x64xf32>
    %33 = arith.maximumf %31, %32 : vector<16x64xf32>
    %c0_30 = arith.constant 0 : index
    %c0_31 = arith.constant 0 : index
    %34 = vector.load %arg11[%c0_30, %c0_31] : memref<64x32xf32, #tpu.memory_space<vmem>>, vector<64x32xf32>
    %cst_32 = arith.constant dense<0.000000e+00> : vector<16x32xf32>
    %35 = tpu.matmul %33, %34, %cst_32 {dimension_numbers = #tpu.dot_dimension_numbers<[1], [0], [0], [1], [0, 0, 1, 1], [], []>} : vector<16x64xf32>, vector<64x32xf32>, vector<16x32xf32> -> vector<16x32xf32>
    %c0_33 = arith.constant 0 : index
    %c0_34 = arith.constant 0 : index
    %36 = vector.load %arg12[%c0_33, %c0_34] : memref<1x32xf32, #tpu.memory_space<vmem>>, vector<1x32xf32>
    %37 = vector.broadcast %36 : vector<1x32xf32> to vector<16x32xf32>
    %38 = arith.addf %35, %37 : vector<16x32xf32>
    %cst_35 = arith.constant 0.000000e+00 : f32
    %39 = vector.broadcast %cst_35 : f32 to vector<16x32xf32>
    %40 = arith.maximumf %38, %39 : vector<16x32xf32>
    %c0_36 = arith.constant 0 : index
    %c0_37 = arith.constant 0 : index
    %41 = vector.load %arg13[%c0_36, %c0_37] : memref<16x32xf32, #tpu.memory_space<vmem>>, vector<16x32xf32>
    tpu.vector_store %arg13[%c0_36, %c0_37], %40 {strides = array<i32>} : memref<16x32xf32, #tpu.memory_space<vmem>>, vector<16x32xf32>,
    return
  }
  func.func @transform_0(%arg0: i32) -> (i32, i32) {
    %c0_i32 = arith.constant 0 : i32
    %c0_i32_0 = arith.constant 0 : i32
    return %arg0, %c0_i32 : i32, i32
  }
  func.func @transform_1(%arg0: i32) -> (i32, i32) {
    %c0_i32 = arith.constant 0 : i32
    %c0_i32_0 = arith.constant 0 : i32
    return %arg0, %c0_i32 : i32, i32
  }
  func.func @transform_2(%arg0: i32) -> (i32, i32) {
    %c0_i32 = arith.constant 0 : i32
    %c0_i32_0 = arith.constant 0 : i32
    return %arg0, %c0_i32 : i32, i32
  }
  func.func @transform_3(%arg0: i32) -> (i32, i32) {
    %c0_i32 = arith.constant 0 : i32
    %c0_i32_0 = arith.constant 0 : i32
    return %arg0, %c0_i32 : i32, i32
  }
  func.func @transform_4(%arg0: i32) -> (i32, i32) {
    %c0_i32 = arith.constant 0 : i32
    %c0_i32_0 = arith.constant 0 : i32
    %c0_i32_1 = arith.constant 0 : i32
    return %c0_i32, %c0_i32_0 : i32, i32
  }
  func.func @transform_5(%arg0: i32) -> (i32, i32) {
    %c0_i32 = arith.constant 0 : i32
    %c0_i32_0 = arith.constant 0 : i32
    %c0_i32_1 = arith.constant 0 : i32
    return %c0_i32, %c0_i32_0 : i32, i32
  }
  func.func @transform_6(%arg0: i32) -> (i32, i32) {
    %c0_i32 = arith.constant 0 : i32
    %c0_i32_0 = arith.constant 0 : i32
    %c0_i32_1 = arith.constant 0 : i32
    return %c0_i32, %c0_i32_0 : i32, i32
  }
  func.func @transform_7(%arg0: i32) -> (i32, i32) {
    %c0_i32 = arith.constant 0 : i32
    %c0_i32_0 = arith.constant 0 : i32
    %c0_i32_1 = arith.constant 0 : i32
    return %c0_i32, %c0_i32_0 : i32, i32
  }
  func.func @transform_8(%arg0: i32) -> (i32, i32) {
    %c0_i32 = arith.constant 0 : i32
    %c0_i32_0 = arith.constant 0 : i32
    %c0_i32_1 = arith.constant 0 : i32
    return %c0_i32, %c0_i32_0 : i32, i32
  }
  func.func @transform_9(%arg0: i32) -> (i32, i32) {
    %c0_i32 = arith.constant 0 : i32
    %c0_i32_0 = arith.constant 0 : i32
    %c0_i32_1 = arith.constant 0 : i32
    return %c0_i32, %c0_i32_0 : i32, i32
  }
  func.func @transform_10(%arg0: i32) -> (i32, i32) {
    %c0_i32 = arith.constant 0 : i32
    %c0_i32_0 = arith.constant 0 : i32
    %c0_i32_1 = arith.constant 0 : i32
    return %c0_i32, %c0_i32_0 : i32, i32
  }
  func.func @transform_11(%arg0: i32) -> (i32, i32) {
    %c0_i32 = arith.constant 0 : i32
    %c0_i32_0 = arith.constant 0 : i32
    %c0_i32_1 = arith.constant 0 : i32
    return %c0_i32, %c0_i32_0 : i32, i32
  }
  func.func @transform_12(%arg0: i32) -> (i32, i32) {
    %c0_i32 = arith.constant 0 : i32
    %c0_i32_0 = arith.constant 0 : i32
    return %arg0, %c0_i32 : i32, i32
  }
}

</mosaic_0001>

<llo_original>
// kernel: tpu_custom_call.1
$region0: #{tpu_custom_call.1}
  #allocation0 [shape = 'u32[]', space=smem, size = 0x4, offset = 0x4, fixed_abs, tag = 'smem constant byte address 0x4 - core index']
  #allocation1 [shape = 'u32[72,128]{1,0:T(1,128)}', space=vmem, size = 0x9000, scoped, tag = 'internal scratch']
  %s0 = inlined_call_operand.vmem [shape: f32[32,16], index: 0, kind: input, shape index: {}]
  %s1 = inlined_call_operand.vmem [shape: f32[32,16], index: 1, kind: input, shape index: {}]
  %s2 = inlined_call_operand.vmem [shape: f32[32,16], index: 2, kind: input, shape index: {}]
  %s3 = inlined_call_operand.vmem [shape: f32[32,16], index: 3, kind: input, shape index: {}]
  %s4 = inlined_call_operand.vmem [shape: f32[64,128], index: 4, kind: input, shape index: {}]
  %s5 = inlined_call_operand.vmem [shape: f32[1,128], index: 5, kind: input, shape index: {}]
  %s6 = inlined_call_operand.vmem [shape: f32[128,128], index: 6, kind: input, shape index: {}]
  %s7 = inlined_call_operand.vmem [shape: f32[1,128], index: 7, kind: input, shape index: {}]
  %s8 = inlined_call_operand.vmem [shape: f32[128,64], index: 8, kind: input, shape index: {}]
  %s9 = inlined_call_operand.vmem [shape: f32[1,64], index: 9, kind: input, shape index: {}]
  %s10 = inlined_call_operand.vmem [shape: f32[64,32], index: 10, kind: input, shape index: {}]
  %s11 = inlined_call_operand.vmem [shape: f32[1,32], index: 11, kind: input, shape index: {}]
  %s12 = inlined_call_operand.hbm [shape: f32[32,32], index: 12, kind: output, shape index: {}]
  %s13 = sld [smem:[#allocation0]]
  $region81: #{tpu_custom_call.1} parent=0
    _
  %s15 = ssub.s32 1, %s13
  %s16 = scalar_select 0, %s15, %s13
  $region1: #{tpu_custom_call.1} parent=0
    #allocation2 [shape = 'u8[16384]{0}', space=vmem, size = 0x4000, scoped, tag = 'output window, operand 0']
    #allocation3 [shape = 's32[2]{0}', space=sflag, size = 0x8, scoped, tag = 'scoped memory for tpu_custom_call.1']
    %17 = vsyncpa [#allocation3], 0
    %s18 = scalar_lea.sflag [#allocation3], 1
    %19 = vsyncpa %s18, 0
    loop: start=0, step=1, limit=4
    $region2: #{tpu_custom_call.1} parent=1 // loop_pre_header
      _
    $region3: #{tpu_custom_call.1} parent=1 // loop_header
      %s21 = sphi 0, %s25
      %p22 = scmp.ge.s32.totalorder %s21, 4
      %s31 = sphi 0, %s33
      %s34 = sphi 0, %s31
      %s35 = sphi 0, %s34
      %s51 = sphi 0, %s35
      %s57 = sphi 0, %s59
      %s60 = sphi 0, %s57
      %s61 = sphi 0, %s60
      %s77 = sphi 0, %s61
      %s83 = sphi 0, %s85
      %s86 = sphi 0, %s83
      %s87 = sphi 0, %s86
      %s103 = sphi 0, %s87
      %s109 = sphi 0, %s111
      %s112 = sphi 0, %s109
      %s113 = sphi 0, %s112
      %s129 = sphi 0, %s113
      %s133 = sphi 0, %s133
      %s135 = sphi 0, %s133
      %s136 = sphi 0, %s135
      %s150 = sphi 0, %s136
      %s154 = sphi 0, %s154
      %s156 = sphi 0, %s154
      %s157 = sphi 0, %s156
      %s171 = sphi 0, %s157
      %s175 = sphi 0, %s175
      %s177 = sphi 0, %s175
      %s178 = sphi 0, %s177
      %s192 = sphi 0, %s178
      %s196 = sphi 0, %s196
      %s198 = sphi 0, %s196
      %s199 = sphi 0, %s198
      %s213 = sphi 0, %s199
      %s217 = sphi 0, %s217
      %s219 = sphi 0, %s217
      %s220 = sphi 0, %s219
      %s234 = sphi 0, %s220
      %s238 = sphi 0, %s238
      %s240 = sphi 0, %s238
      %s241 = sphi 0, %s240
      %s255 = sphi 0, %s241
      %s259 = sphi 0, %s259
      %s261 = sphi 0, %s259
      %s262 = sphi 0, %s261
      %s276 = sphi 0, %s262
      %s280 = sphi 0, %s280
      %s282 = sphi 0, %s280
      %s283 = sphi 0, %s282
      %s297 = sphi 0, %s283
      %s303 = sphi 0, %s305
      %s306 = sphi 0, %s303
      %s307 = sphi 0, %s306
      %s323 = sphi 0, %s307
    $region4: #{tpu_custom_call.1} parent=1 // loop_header_branch
      %24 = sbr.rel (%p22) target = $region8
    $region5: #{tpu_custom_call.1} parent=1 // loop_body
      %s26 = ssub.s32 %s21, 1
      %s27 = ssub.s32 %s21, 2
      %s28 = sadd.s32 %s21, 1
      %s29 = ssub.s32 %s21, %s28
      %p30 = scmp.eq.s32.totalorder %s29, 0
      %s32 = sadd.s32 %s31, 1
      %s33 = scalar_select %p30, %s31, %s32
      %p36 = pneg %p30
      %p37 = scmp.eq.s32.totalorder %s21, 1
      %p38 = por %p36, %p37
      %p39 = scmp.ne.s32.totalorder %s31, %s34
      %p40 = scmp.eq.s32.totalorder %s21, 0
      %p41 = por %p39, %p40
      %p42 = scmp.ne.s32.totalorder %s31, %s34
      %p43 = scmp.eq.s32.totalorder %s26, 1
      %p44 = por %p42, %p43
      %p45 = scmp.ne.s32.totalorder %s34, %s35
      %p46 = scmp.eq.s32.totalorder %s26, 0
      %p47 = por %p45, %p46
      %p48 = scmp.ne.s32.totalorder %s34, %s35
      %p49 = scmp.eq.s32.totalorder %s27, 1
      %p50 = por %p48, %p49
      %p52 = scmp.ne.s32.totalorder %s35, %s51
      %p53 = scmp.eq.s32.totalorder %s27, 0
      %p54 = por %p52, %p53
      %s55 = ssub.s32 %s21, %s28
      %p56 = scmp.eq.s32.totalorder %s55, 0
      %s58 = sadd.s32 %s57, 1
      %s59 = scalar_select %p56, %s57, %s58
      %p62 = pneg %p56
      %p63 = scmp.eq.s32.totalorder %s21, 1
      %p64 = por %p62, %p63
      %p65 = scmp.ne.s32.totalorder %s57, %s60
      %p66 = scmp.eq.s32.totalorder %s21, 0
      %p67 = por %p65, %p66
      %p68 = scmp.ne.s32.totalorder %s57, %s60
      %p69 = scmp.eq.s32.totalorder %s26, 1
      %p70 = por %p68, %p69
      %p71 = scmp.ne.s32.totalorder %s60, %s61
      %p72 = scmp.eq.s32.totalorder %s26, 0
      %p73 = por %p71, %p72
      %p74 = scmp.ne.s32.totalorder %s60, %s61
      %p75 = scmp.eq.s32.totalorder %s27, 1
      %p76 = por %p74, %p75
      %p78 = scmp.ne.s32.totalorder %s61, %s77
      %p79 = scmp.eq.s32.totalorder %s27, 0
      %p80 = por %p78, %p79
      %s81 = ssub.s32 %s21, %s28
      %p82 = scmp.eq.s32.totalorder %s81, 0
      %s84 = sadd.s32 %s83, 1
      %s85 = scalar_select %p82, %s83, %s84
      %p88 = pneg %p82
      %p89 = scmp.eq.s32.totalorder %s21, 1
      %p90 = por %p88, %p89
      %p91 = scmp.ne.s32.totalorder %s83, %s86
      %p92 = scmp.eq.s32.totalorder %s21, 0
      %p93 = por %p91, %p92
      %p94 = scmp.ne.s32.totalorder %s83, %s86
      %p95 = scmp.eq.s32.totalorder %s26, 1
      %p96 = por %p94, %p95
      %p97 = scmp.ne.s32.totalorder %s86, %s87
      %p98 = scmp.eq.s32.totalorder %s26, 0
      %p99 = por %p97, %p98
      %p100 = scmp.ne.s32.totalorder %s86, %s87
      %p101 = scmp.eq.s32.totalorder %s27, 1
      %p102 = por %p100, %p101
      %p104 = scmp.ne.s32.totalorder %s87, %s103
      %p105 = scmp.eq.s32.totalorder %s27, 0
      %p106 = por %p104, %p105
      %s107 = ssub.s32 %s21, %s28
      %p108 = scmp.eq.s32.totalorder %s107, 0
      %s110 = sadd.s32 %s109, 1
      %s111 = scalar_select %p108, %s109, %s110
      %p114 = pneg %p108
      %p115 = scmp.eq.s32.totalorder %s21, 1
      %p116 = por %p114, %p115
      %p117 = scmp.ne.s32.totalorder %s109, %s112
      %p118 = scmp.eq.s32.totalorder %s21, 0
      %p119 = por %p117, %p118
      %p120 = scmp.ne.s32.totalorder %s109, %s112
      %p121 = scmp.eq.s32.totalorder %s26, 1
      %p122 = por %p120, %p121
      %p123 = scmp.ne.s32.totalorder %s112, %s113
      %p124 = scmp.eq.s32.totalorder %s26, 0
      %p125 = por %p123, %p124
      %p126 = scmp.ne.s32.totalorder %s112, %s113
      %p127 = scmp.eq.s32.totalorder %s27, 1
      %p128 = por %p126, %p127
      %p130 = scmp.ne.s32.totalorder %s113, %s129
      %p131 = scmp.eq.s32.totalorder %s27, 0
      %p132 = por %p130, %p131
      %s134 = sadd.s32 %s133, 1
      %p137 = scmp.eq.s32.totalorder %s21, 1
      %p138 = scmp.ne.s32.totalorder %s133, %s135
      %p139 = scmp.eq.s32.totalorder %s21, 0
      %p140 = por %p138, %p139
      %p141 = scmp.ne.s32.totalorder %s133, %s135
      %p142 = scmp.eq.s32.totalorder %s26, 1
      %p143 = por %p141, %p142
      %p144 = scmp.ne.s32.totalorder %s135, %s136
      %p145 = scmp.eq.s32.totalorder %s26, 0
      %p146 = por %p144, %p145
      %p147 = scmp.ne.s32.totalorder %s135, %s136
      %p148 = scmp.eq.s32.totalorder %s27, 1
      %p149 = por %p147, %p148
      %p151 = scmp.ne.s32.totalorder %s136, %s150
      %p152 = scmp.eq.s32.totalorder %s27, 0
      %p153 = por %p151, %p152
      %s155 = sadd.s32 %s154, 1
      %p158 = scmp.eq.s32.totalorder %s21, 1
      %p159 = scmp.ne.s32.totalorder %s154, %s156
      %p160 = scmp.eq.s32.totalorder %s21, 0
      %p161 = por %p159, %p160
      %p162 = scmp.ne.s32.totalorder %s154, %s156
      %p163 = scmp.eq.s32.totalorder %s26, 1
      %p164 = por %p162, %p163
      %p165 = scmp.ne.s32.totalorder %s156, %s157
      %p166 = scmp.eq.s32.totalorder %s26, 0
      %p167 = por %p165, %p166
      %p168 = scmp.ne.s32.totalorder %s156, %s157
      %p169 = scmp.eq.s32.totalorder %s27, 1
      %p170 = por %p168, %p169
      %p172 = scmp.ne.s32.totalorder %s157, %s171
      %p173 = scmp.eq.s32.totalorder %s27, 0
      %p174 = por %p172, %p173
      %s176 = sadd.s32 %s175, 1
      %p179 = scmp.eq.s32.totalorder %s21, 1
      %p180 = scmp.ne.s32.totalorder %s175, %s177
      %p181 = scmp.eq.s32.totalorder %s21, 0
      %p182 = por %p180, %p181
      %p183 = scmp.ne.s32.totalorder %s175, %s177
      %p184 = scmp.eq.s32.totalorder %s26, 1
      %p185 = por %p183, %p184
      %p186 = scmp.ne.s32.totalorder %s177, %s178
      %p187 = scmp.eq.s32.totalorder %s26, 0
      %p188 = por %p186, %p187
      %p189 = scmp.ne.s32.totalorder %s177, %s178
      %p190 = scmp.eq.s32.totalorder %s27, 1
      %p191 = por %p189, %p190
      %p193 = scmp.ne.s32.totalorder %s178, %s192
      %p194 = scmp.eq.s32.totalorder %s27, 0
      %p195 = por %p193, %p194
      %s197 = sadd.s32 %s196, 1
      %p200 = scmp.eq.s32.totalorder %s21, 1
      %p201 = scmp.ne.s32.totalorder %s196, %s198
      %p202 = scmp.eq.s32.totalorder %s21, 0
      %p203 = por %p201, %p202
      %p204 = scmp.ne.s32.totalorder %s196, %s198
      %p205 = scmp.eq.s32.totalorder %s26, 1
      %p206 = por %p204, %p205
      %p207 = scmp.ne.s32.totalorder %s198, %s199
      %p208 = scmp.eq.s32.totalorder %s26, 0
      %p209 = por %p207, %p208
      %p210 = scmp.ne.s32.totalorder %s198, %s199
      %p211 = scmp.eq.s32.totalorder %s27, 1
      %p212 = por %p210, %p211
      %p214 = scmp.ne.s32.totalorder %s199, %s213
      %p215 = scmp.eq.s32.totalorder %s27, 0
      %p216 = por %p214, %p215
      %s218 = sadd.s32 %s217, 1
      %p221 = scmp.eq.s32.totalorder %s21, 1
      %p222 = scmp.ne.s32.totalorder %s217, %s219
      %p223 = scmp.eq.s32.totalorder %s21, 0
      %p224 = por %p222, %p223
      %p225 = scmp.ne.s32.totalorder %s217, %s219
      %p226 = scmp.eq.s32.totalorder %s26, 1
      %p227 = por %p225, %p226
      %p228 = scmp.ne.s32.totalorder %s219, %s220
      %p229 = scmp.eq.s32.totalorder %s26, 0
      %p230 = por %p228, %p229
      %p231 = scmp.ne.s32.totalorder %s219, %s220
      %p232 = scmp.eq.s32.totalorder %s27, 1
      %p233 = por %p231, %p232
      %p235 = scmp.ne.s32.totalorder %s220, %s234
      %p236 = scmp.eq.s32.totalorder %s27, 0
      %p237 = por %p235, %p236
      %s239 = sadd.s32 %s238, 1
      %p242 = scmp.eq.s32.totalorder %s21, 1
      %p243 = scmp.ne.s32.totalorder %s238, %s240
      %p244 = scmp.eq.s32.totalorder %s21, 0
      %p245 = por %p243, %p244
      %p246 = scmp.ne.s32.totalorder %s238, %s240
      %p247 = scmp.eq.s32.totalorder %s26, 1
      %p248 = por %p246, %p247
      %p249 = scmp.ne.s32.totalorder %s240, %s241
      %p250 = scmp.eq.s32.totalorder %s26, 0
      %p251 = por %p249, %p250
      %p252 = scmp.ne.s32.totalorder %s240, %s241
      %p253 = scmp.eq.s32.totalorder %s27, 1
      %p254 = por %p252, %p253
      %p256 = scmp.ne.s32.totalorder %s241, %s255
      %p257 = scmp.eq.s32.totalorder %s27, 0
      %p258 = por %p256, %p257
      %s260 = sadd.s32 %s259, 1
      %p263 = scmp.eq.s32.totalorder %s21, 1
      %p264 = scmp.ne.s32.totalorder %s259, %s261
      %p265 = scmp.eq.s32.totalorder %s21, 0
      %p266 = por %p264, %p265
      %p267 = scmp.ne.s32.totalorder %s259, %s261
      %p268 = scmp.eq.s32.totalorder %s26, 1
      %p269 = por %p267, %p268
      %p270 = scmp.ne.s32.totalorder %s261, %s262
      %p271 = scmp.eq.s32.totalorder %s26, 0
      %p272 = por %p270, %p271
      %p273 = scmp.ne.s32.totalorder %s261, %s262
      %p274 = scmp.eq.s32.totalorder %s27, 1
      %p275 = por %p273, %p274
      %p277 = scmp.ne.s32.totalorder %s262, %s276
      %p278 = scmp.eq.s32.totalorder %s27, 0
      %p279 = por %p277, %p278
      %s281 = sadd.s32 %s280, 1
      %p284 = scmp.eq.s32.totalorder %s21, 1
      %p285 = scmp.ne.s32.totalorder %s280, %s282
      %p286 = scmp.eq.s32.totalorder %s21, 0
      %p287 = por %p285, %p286
      %p288 = scmp.ne.s32.totalorder %s280, %s282
      %p289 = scmp.eq.s32.totalorder %s26, 1
      %p290 = por %p288, %p289
      %p291 = scmp.ne.s32.totalorder %s282, %s283
      %p292 = scmp.eq.s32.totalorder %s26, 0
      %p293 = por %p291, %p292
      %p294 = scmp.ne.s32.totalorder %s282, %s283
      %p295 = scmp.eq.s32.totalorder %s27, 1
      %p296 = por %p294, %p295
      %p298 = scmp.ne.s32.totalorder %s283, %s297
      %p299 = scmp.eq.s32.totalorder %s27, 0
      %p300 = por %p298, %p299
      %s301 = ssub.s32 %s21, %s28
      %p302 = scmp.eq.s32.totalorder %s301, 0
      %s304 = sadd.s32 %s303, 1
      %s305 = scalar_select %p302, %s303, %s304
      %p308 = pneg %p302
      %p309 = scmp.eq.s32.totalorder %s21, 1
      %p310 = por %p308, %p309
      %p311 = scmp.ne.s32.totalorder %s303, %s306
      %p312 = scmp.eq.s32.totalorder %s21, 0
      %p313 = por %p311, %p312
      %p314 = scmp.ne.s32.totalorder %s303, %s306
      %p315 = scmp.eq.s32.totalorder %s26, 1
      %p316 = por %p314, %p315
      %p317 = scmp.ne.s32.totalorder %s306, %s307
      %p318 = scmp.eq.s32.totalorder %s26, 0
      %p319 = por %p317, %p318
      %p320 = scmp.ne.s32.totalorder %s306, %s307
      %p321 = scmp.eq.s32.totalorder %s27, 1
      %p322 = por %p320, %p321
      %p324 = scmp.ne.s32.totalorder %s307, %s323
      %p325 = scmp.eq.s32.totalorder %s27, 0
      %p326 = por %p324, %p325
      %p327 = scmp.le.s32.totalorder 1, %s21
      %p328 = scmp.lt.s32.totalorder %s21, 3
      %p329 = pnand %p327, %p328
      %p330 = pneg %p329
      // Predicated region
      $region9: #{tpu_custom_call.1} parent=5 // pred_check
        _
      $region10: #{tpu_custom_call.1} parent=5 // pred_check_branch
        %332 = sbr.rel (%p329) target = $region12
      $region11: #{tpu_custom_call.1} parent=5 // pred_region
        %s333 = ssub.s32 %s21, 1
        // Predicated region
        $region13: #{tpu_custom_call.1} parent=11 // pred_check
          %p334 = pneg %p146
        $region14: #{tpu_custom_call.1} parent=11 // pred_check_branch
          %336 = sbr.rel (%p334) target = $region16
        $region15: #{tpu_custom_call.1} parent=11 // pred_region
          _
        $region16: #{tpu_custom_call.1} parent=11 // pred_fallthru
          _
        // Predicated region
        $region17: #{tpu_custom_call.1} parent=11 // pred_check
          %p337 = pneg %p167
        $region18: #{tpu_custom_call.1} parent=11 // pred_check_branch
          %339 = sbr.rel (%p337) target = $region20
        $region19: #{tpu_custom_call.1} parent=11 // pred_region
          _
        $region20: #{tpu_custom_call.1} parent=11 // pred_fallthru
          _
        // Predicated region
        $region21: #{tpu_custom_call.1} parent=11 // pred_check
          %p340 = pneg %p188
        $region22: #{tpu_custom_call.1} parent=11 // pred_check_branch
          %342 = sbr.rel (%p340) target = $region24
        $region23: #{tpu_custom_call.1} parent=11 // pred_region
          _
        $region24: #{tpu_custom_call.1} parent=11 // pred_fallthru
          _
        // Predicated region
        $region25: #{tpu_custom_call.1} parent=11 // pred_check
          %p343 = pneg %p209
        $region26: #{tpu_custom_call.1} parent=11 // pred_check_branch
          %345 = sbr.rel (%p343) target = $region28
        $region27: #{tpu_custom_call.1} parent=11 // pred_region
          _
        $region28: #{tpu_custom_call.1} parent=11 // pred_fallthru
          _
        // Predicated region
        $region29: #{tpu_custom_call.1} parent=11 // pred_check
          %p346 = pneg %p230
        $region30: #{tpu_custom_call.1} parent=11 // pred_check_branch
          %348 = sbr.rel (%p346) target = $region32
        $region31: #{tpu_custom_call.1} parent=11 // pred_region
          _
        $region32: #{tpu_custom_call.1} parent=11 // pred_fallthru
          _
        // Predicated region
        $region33: #{tpu_custom_call.1} parent=11 // pred_check
          %p349 = pneg %p251
        $region34: #{tpu_custom_call.1} parent=11 // pred_check_branch
          %351 = sbr.rel (%p349) target = $region36
        $region35: #{tpu_custom_call.1} parent=11 // pred_region
          _
        $region36: #{tpu_custom_call.1} parent=11 // pred_fallthru
          _
        // Predicated region
        $region37: #{tpu_custom_call.1} parent=11 // pred_check
          %p352 = pneg %p272
        $region38: #{tpu_custom_call.1} parent=11 // pred_check_branch
          %354 = sbr.rel (%p352) target = $region40
        $region39: #{tpu_custom_call.1} parent=11 // pred_region
          _
        $region40: #{tpu_custom_call.1} parent=11 // pred_fallthru
          _
        // Predicated region
        $region41: #{tpu_custom_call.1} parent=11 // pred_check
          %p355 = pneg %p293
        $region42: #{tpu_custom_call.1} parent=11 // pred_check_branch
          %357 = sbr.rel (%p355) target = $region44
        $region43: #{tpu_custom_call.1} parent=11 // pred_region
          _
        $region44: #{tpu_custom_call.1} parent=11 // pred_fallthru
          _
      $region12: #{tpu_custom_call.1} parent=5 // pred_fallthru
        _
      %p358 = scmp.lt.s32.totalorder %s21, 2
      // Predicated region
      $region45: #{tpu_custom_call.1} parent=5 // pred_check
        %p359 = pneg %p358
      $region46: #{tpu_custom_call.1} parent=5 // pred_check_branch
        %361 = sbr.rel (%p359) target = $region48
      $region47: #{tpu_custom_call.1} parent=5 // pred_region
        // Predicated region
        $region49: #{tpu_custom_call.1} parent=47 // pred_check
          %p362 = pneg %p41
        $region50: #{tpu_custom_call.1} parent=47 // pred_check_branch
          %364 = sbr.rel (%p362) target = $region52
        $region51: #{tpu_custom_call.1} parent=47 // pred_region
          %s365 = smul.u32 2, %s21
          %p366 = scmp.lt.s32.totalorder %s365, 3
          %s367 = scalar_select %p366, %s365, 3
          %s368 = smul.addr %s367, 8
          %s369 = scalar_lea.vmem %s0, %s368
          %s370 = smul.u32 2, %s21
        $region52: #{tpu_custom_call.1} parent=47 // pred_fallthru
          _
        // Predicated region
        $region53: #{tpu_custom_call.1} parent=47 // pred_check
          %p371 = pneg %p67
        $region54: #{tpu_custom_call.1} parent=47 // pred_check_branch
          %373 = sbr.rel (%p371) target = $region56
        $region55: #{tpu_custom_call.1} parent=47 // pred_region
          %s374 = smul.u32 2, %s21
          %p375 = scmp.lt.s32.totalorder %s374, 3
          %s376 = scalar_select %p375, %s374, 3
          %s377 = smul.addr %s376, 8
          %s378 = scalar_lea.vmem %s1, %s377
          %s379 = smul.u32 2, %s21
        $region56: #{tpu_custom_call.1} parent=47 // pred_fallthru
          _
        // Predicated region
        $region57: #{tpu_custom_call.1} parent=47 // pred_check
          %p380 = pneg %p93
        $region58: #{tpu_custom_call.1} parent=47 // pred_check_branch
          %382 = sbr.rel (%p380) target = $region60
        $region59: #{tpu_custom_call.1} parent=47 // pred_region
          %s383 = smul.u32 2, %s21
          %p384 = scmp.lt.s32.totalorder %s383, 3
          %s385 = scalar_select %p384, %s383, 3
          %s386 = smul.addr %s385, 8
          %s387 = scalar_lea.vmem %s2, %s386
          %s388 = smul.u32 2, %s21
        $region60: #{tpu_custom_call.1} parent=47 // pred_fallthru
          _
        // Predicated region
        $region61: #{tpu_custom_call.1} parent=47 // pred_check
          %p389 = pneg %p119
        $region62: #{tpu_custom_call.1} parent=47 // pred_check_branch
          %391 = sbr.rel (%p389) target = $region64
        $region63: #{tpu_custom_call.1} parent=47 // pred_region
          %s392 = smul.u32 2, %s21
          %p393 = scmp.lt.s32.totalorder %s392, 3
          %s394 = scalar_select %p393, %s392, 3
          %s395 = smul.addr %s394, 8
          %s396 = scalar_lea.vmem %s3, %s395
          %s397 = smul.u32 2, %s21
        $region64: #{tpu_custom_call.1} parent=47 // pred_fallthru
          _
      $region48: #{tpu_custom_call.1} parent=5 // pred_fallthru
        _
      %p398 = scmp.le.s32.totalorder 1, %s21
      %p399 = scmp.lt.s32.totalorder %s21, 3
      %p400 = pnand %p398, %p399
      %p401 = pneg %p400
      // Predicated region
      $region65: #{tpu_custom_call.1} parent=5 // pred_check
        _
      $region66: #{tpu_custom_call.1} parent=5 // pred_check_branch
        %403 = sbr.rel (%p400) target = $region68
      $region67: #{tpu_custom_call.1} parent=5 // pred_region
        %s404 = ssub.s32 %s21, 1
        %s405 = smul.u32 2, %s26
        %p406 = scmp.lt.s32.totalorder %s405, 3
        %s407 = scalar_select %p406, %s405, 3
        %s408 = smul.addr %s407, 8
        %s409 = scalar_lea.vmem %s0, %s408
        %p410 = pneg %p47
        %p411 = pneg %p44
        %s412 = smul.u32 2, %s26
        %p413 = scmp.lt.s32.totalorder %s412, 3
        %s414 = scalar_select %p413, %s412, 3
        %s415 = smul.addr %s414, 8
        %s416 = scalar_lea.vmem %s1, %s415
        %p417 = pneg %p73
        %p418 = pneg %p70
        %s419 = smul.u32 2, %s26
        %p420 = scmp.lt.s32.totalorder %s419, 3
        %s421 = scalar_select %p420, %s419, 3
        %s422 = smul.addr %s421, 8
        %s423 = scalar_lea.vmem %s2, %s422
        %p424 = pneg %p99
        %p425 = pneg %p96
        %s426 = smul.u32 2, %s26
        %p427 = scmp.lt.s32.totalorder %s426, 3
        %s428 = scalar_select %p427, %s426, 3
        %s429 = smul.addr %s428, 8
        %s430 = scalar_lea.vmem %s3, %s429
        %p431 = pneg %p125
        %p432 = pneg %p122
        %p433 = pneg %p146
        %p434 = pneg %p143
        %p435 = pneg %p167
        %p436 = pneg %p164
        %p437 = pneg %p188
        %p438 = pneg %p185
        %p439 = pneg %p209
        %p440 = pneg %p206
        %p441 = pneg %p230
        %p442 = pneg %p227
        %p443 = pneg %p251
        %p444 = pneg %p248
        %p445 = pneg %p272
        %p446 = pneg %p269
        %p447 = pneg %p293
        %p448 = pneg %p290
        %p449 = pneg %p319
        %p450 = pneg %p316
        %s451 = sand.u32 %s306, 1
        %s452 = scalar_lea.sflag [#allocation3], %s451
        %s453 = sand.u32 %s306, 1
        %s454 = smul.addr %s453, 16
        %s455 = scalar_lea.vmem [#allocation2], %s454
        %s456 = smul.u32 2, %s26
        %p457 = scmp.lt.s32.totalorder %s456, 3
        %s458 = scalar_select %p457, %s456, 3
        %s459 = smul.addr %s458, 8
        %s460 = scalar_lea.vmem %s0, %s459
        %s461 = smul.u32 2, %s26
        %s462 = smul.u32 2, %s26
        %p463 = scmp.lt.s32.totalorder %s462, 3
        %s464 = scalar_select %p463, %s462, 3
        %s465 = smul.addr %s464, 8
        %s466 = scalar_lea.vmem %s1, %s465
        %s467 = smul.u32 2, %s26
        %s468 = smul.u32 2, %s26
        %p469 = scmp.lt.s32.totalorder %s468, 3
        %s470 = scalar_select %p469, %s468, 3
        %s471 = smul.addr %s470, 8
        %s472 = scalar_lea.vmem %s2, %s471
        %s473 = smul.u32 2, %s26
        %s474 = smul.u32 2, %s26
        %p475 = scmp.lt.s32.totalorder %s474, 3
        %s476 = scalar_select %p475, %s474, 3
        %s477 = smul.addr %s476, 8
        %s478 = scalar_lea.vmem %s3, %s477
        %s479 = smul.u32 2, %s26
        %s480 = smul.u32 2, %s26
        %v481 = vld [vmem:[%s460] sm:$0xff]
        %v482 = vld [vmem:[%s460 + $0x8] sm:$0xff]
        %v483 = vld [vmem:[%s4] sm:$0xff]
        %v484 = vld [vmem:[%s4 + $0x8] sm:$0xff]
        %v485 = vld [vmem:[%s466] sm:$0xff]
        %v486 = vld [vmem:[%s466 + $0x8] sm:$0xff]
        %v487 = vld [vmem:[%s4 + $0x10] sm:$0xff]
        %v488 = vld [vmem:[%s4 + $0x18] sm:$0xff]
        %vm489 = vcmask 130048
        %v491 = vsel %vm489, %v485, 0
        %v494 = vsel %vm489, %v486, 0
        %496 = vmatpush.msra.mxu0 0.0
        %497 = vmatpush.msra.mxu0 0.0
        %498 = vmatpush.msra.mxu0 0.0
        %499 = vmatpush.msra.mxu0 0.0
        %500 = vmatpush.msra.mxu0 0.0
        %501 = vmatpush.msra.mxu0 0.0
        %502 = vmatpush.msra.mxu0 0.0
        %503 = vmatpush.msra.mxu0 0.0
        %504 = vmatpush.msra.mxu0 0.0
        %505 = vmatpush.msra.mxu0 0.0
        %506 = vmatpush.msra.mxu0 0.0
        %507 = vmatpush.msra.mxu0 0.0
        %508 = vmatpush.msra.mxu0 0.0
        %509 = vmatpush.msra.mxu0 0.0
        %510 = vmatpush.msra.mxu0 %v488
        %511 = vmatpush.msra.mxu0 %v487
        %512 = vmatmul.f32.gmra.mxu0 %v491
        %v513 = vpop.f32.mrf.mxu0
        %v514 = vadd.f32 0.0, %v513
        %515 = vmatmul.f32.gmra.mxu0 %v494
        %v516 = vpop.f32.mrf.mxu0
        %v517 = vadd.f32 0.0, %v516
        %518 = vdwg.mxu0
        %v520 = vsel %vm489, %v481, 0
        %v523 = vsel %vm489, %v482, 0
        %525 = vmatpush.msra.mxu0 0.0
        %526 = vmatpush.msra.mxu0 0.0
        %527 = vmatpush.msra.mxu0 0.0
        %528 = vmatpush.msra.mxu0 0.0
        %529 = vmatpush.msra.mxu0 0.0
        %530 = vmatpush.msra.mxu0 0.0
        %531 = vmatpush.msra.mxu0 0.0
        %532 = vmatpush.msra.mxu0 0.0
        %533 = vmatpush.msra.mxu0 0.0
        %534 = vmatpush.msra.mxu0 0.0
        %535 = vmatpush.msra.mxu0 0.0
        %536 = vmatpush.msra.mxu0 0.0
        %537 = vmatpush.msra.mxu0 0.0
        %538 = vmatpush.msra.mxu0 0.0
        %539 = vmatpush.msra.mxu0 %v484
        %540 = vmatpush.msra.mxu0 %v483
        %541 = vmatmul.f32.gmra.mxu0 %v520
        %v542 = vpop.f32.mrf.mxu0
        %v543 = vadd.f32 %v514, %v542
        %544 = vmatmul.f32.gmra.mxu0 %v523
        %v545 = vpop.f32.mrf.mxu0
        %v546 = vadd.f32 %v517, %v545
        %547 = vdwg.mxu0
        %v548 = vld [vmem:[%s472] sm:$0xff]
        %v549 = vld [vmem:[%s472 + $0x8] sm:$0xff]
        %v550 = vld [vmem:[%s4 + $0x20] sm:$0xff]
        %v551 = vld [vmem:[%s4 + $0x28] sm:$0xff]
        %v553 = vsel %vm489, %v548, 0
        %v556 = vsel %vm489, %v549, 0
        %558 = vmatpush.msra.mxu0 0.0
        %559 = vmatpush.msra.mxu0 0.0
        %560 = vmatpush.msra.mxu0 0.0
        %561 = vmatpush.msra.mxu0 0.0
        %562 = vmatpush.msra.mxu0 0.0
        %563 = vmatpush.msra.mxu0 0.0
        %564 = vmatpush.msra.mxu0 0.0
        %565 = vmatpush.msra.mxu0 0.0
        %566 = vmatpush.msra.mxu0 0.0
        %567 = vmatpush.msra.mxu0 0.0
        %568 = vmatpush.msra.mxu0 0.0
        %569 = vmatpush.msra.mxu0 0.0
        %570 = vmatpush.msra.mxu0 0.0
        %571 = vmatpush.msra.mxu0 0.0
        %572 = vmatpush.msra.mxu0 %v551
        %573 = vmatpush.msra.mxu0 %v550
        %574 = vmatmul.f32.gmra.mxu0 %v553
        %v575 = vpop.f32.mrf.mxu0
        %v576 = vadd.f32 0.0, %v575
        %577 = vmatmul.f32.gmra.mxu0 %v556
        %v578 = vpop.f32.mrf.mxu0
        %v579 = vadd.f32 0.0, %v578
        %580 = vdwg.mxu0
        %v581 = vadd.f32 %v543, %v576
        %v582 = vadd.f32 %v546, %v579
        %v583 = vld [vmem:[%s478] sm:$0xff]
        %v584 = vld [vmem:[%s478 + $0x8] sm:$0xff]
        %v585 = vld [vmem:[%s4 + $0x30] sm:$0xff]
        %v586 = vld [vmem:[%s4 + $0x38] sm:$0xff]
        %v588 = vsel %vm489, %v583, 0
        %v591 = vsel %vm489, %v584, 0
        %593 = vmatpush.msra.mxu0 0.0
        %594 = vmatpush.msra.mxu0 0.0
        %595 = vmatpush.msra.mxu0 0.0
        %596 = vmatpush.msra.mxu0 0.0
        %597 = vmatpush.msra.mxu0 0.0
        %598 = vmatpush.msra.mxu0 0.0
        %599 = vmatpush.msra.mxu0 0.0
        %600 = vmatpush.msra.mxu0 0.0
        %601 = vmatpush.msra.mxu0 0.0
        %602 = vmatpush.msra.mxu0 0.0
        %603 = vmatpush.msra.mxu0 0.0
        %604 = vmatpush.msra.mxu0 0.0
        %605 = vmatpush.msra.mxu0 0.0
        %606 = vmatpush.msra.mxu0 0.0
        %607 = vmatpush.msra.mxu0 %v586
        %608 = vmatpush.msra.mxu0 %v585
        %609 = vmatmul.f32.gmra.mxu0 %v588
        %v610 = vpop.f32.mrf.mxu0
        %v611 = vadd.f32 0.0, %v610
        %612 = vmatmul.f32.gmra.mxu0 %v591
        %v613 = vpop.f32.mrf.mxu0
        %v614 = vadd.f32 0.0, %v613
        %615 = vdwg.mxu0
        %v616 = vadd.f32 %v581, %v611
        %v617 = vadd.f32 %v582, %v614
        %v618 = vld [vmem:[%s5] sm:$0x1]
        %v620 = vperm.slane %v618, 0
        %v622 = vadd.f32 %v616, %v620
        %v623 = vadd.f32 %v617, %v620
        %v624 = vmax.f32 %v622, 0.0
        %v625 = vmax.f32 %v623, 0.0
        %v626 = vld [vmem:[%s6] sm:$0xff]
        %v627 = vld [vmem:[%s6 + $0x8] sm:$0xff]
        %v628 = vld [vmem:[%s6 + $0x10] sm:$0xff]
        %v629 = vld [vmem:[%s6 + $0x18] sm:$0xff]
        %v630 = vld [vmem:[%s6 + $0x20] sm:$0xff]
        %v631 = vld [vmem:[%s6 + $0x28] sm:$0xff]
        %v632 = vld [vmem:[%s6 + $0x30] sm:$0xff]
        %v633 = vld [vmem:[%s6 + $0x38] sm:$0xff]
        %v634 = vld [vmem:[%s6 + $0x40] sm:$0xff]
        %v635 = vld [vmem:[%s6 + $0x48] sm:$0xff]
        %v636 = vld [vmem:[%s6 + $0x50] sm:$0xff]
        %v637 = vld [vmem:[%s6 + $0x58] sm:$0xff]
        %v638 = vld [vmem:[%s6 + $0x60] sm:$0xff]
        %v639 = vld [vmem:[%s6 + $0x68] sm:$0xff]
        %v640 = vld [vmem:[%s6 + $0x70] sm:$0xff]
        %v641 = vld [vmem:[%s6 + $0x78] sm:$0xff]
        %v642 = vld [vmem:[%s7] sm:$0x1]
        %v644 = vperm.slane %v642, 0
        %646 = vmatpush.msra.mxu0 %v641
        %647 = vmatpush.msra.mxu0 %v640
        %648 = vmatpush.msra.mxu0 %v639
        %649 = vmatpush.msra.mxu0 %v638
        %650 = vmatpush.msra.mxu0 %v637
        %651 = vmatpush.msra.mxu0 %v636
        %652 = vmatpush.msra.mxu0 %v635
        %653 = vmatpush.msra.mxu0 %v634
        %654 = vmatpush.msra.mxu0 %v633
        %655 = vmatpush.msra.mxu0 %v632
        %656 = vmatpush.msra.mxu0 %v631
        %657 = vmatpush.msra.mxu0 %v630
        %658 = vmatpush.msra.mxu0 %v629
        %659 = vmatpush.msra.mxu0 %v628
        %660 = vmatpush.msra.mxu0 %v627
        %661 = vmatpush.msra.mxu0 %v626
        %662 = vmatmul.f32.gmra.mxu0 %v624
        %v663 = vpop.f32.mrf.mxu0
        %v664 = vadd.f32 %v644, %v663
        %665 = vmatmul.f32.gmra.mxu0 %v625
        %v666 = vpop.f32.mrf.mxu0
        %v667 = vadd.f32 %v644, %v666
        %668 = vdwg.mxu0
        %v669 = vmax.f32 %v664, 0.0
        %v670 = vmax.f32 %v667, 0.0
        %v671 = vld [vmem:[%s8] sm:$0xff]
        %v672 = vld [vmem:[%s8 + $0x8] sm:$0xff]
        %v673 = vld [vmem:[%s8 + $0x10] sm:$0xff]
        %v674 = vld [vmem:[%s8 + $0x18] sm:$0xff]
        %v675 = vld [vmem:[%s8 + $0x20] sm:$0xff]
        %v676 = vld [vmem:[%s8 + $0x28] sm:$0xff]
        %v677 = vld [vmem:[%s8 + $0x30] sm:$0xff]
        %v678 = vld [vmem:[%s8 + $0x38] sm:$0xff]
        %v679 = vld [vmem:[%s8 + $0x40] sm:$0xff]
        %v680 = vld [vmem:[%s8 + $0x48] sm:$0xff]
        %v681 = vld [vmem:[%s8 + $0x50] sm:$0xff]
        %v682 = vld [vmem:[%s8 + $0x58] sm:$0xff]
        %v683 = vld [vmem:[%s8 + $0x60] sm:$0xff]
        %v684 = vld [vmem:[%s8 + $0x68] sm:$0xff]
        %v685 = vld [vmem:[%s8 + $0x70] sm:$0xff]
        %v686 = vld [vmem:[%s8 + $0x78] sm:$0xff]
        %v687 = vld [vmem:[%s9] sm:$0x1]
        %v689 = vperm.slane %v687, 0
        %691 = vmatpush.msra.mxu0 %v686
        %692 = vmatpush.msra.mxu0 %v685
        %693 = vmatpush.msra.mxu0 %v684
        %694 = vmatpush.msra.mxu0 %v683
        %695 = vmatpush.msra.mxu0 %v682
        %696 = vmatpush.msra.mxu0 %v681
        %697 = vmatpush.msra.mxu0 %v680
        %698 = vmatpush.msra.mxu0 %v679
        %699 = vmatpush.msra.mxu0 %v678
        %700 = vmatpush.msra.mxu0 %v677
        %701 = vmatpush.msra.mxu0 %v676
        %702 = vmatpush.msra.mxu0 %v675
        %703 = vmatpush.msra.mxu0 %v674
        %704 = vmatpush.msra.mxu0 %v673
        %705 = vmatpush.msra.mxu0 %v672
        %706 = vmatpush.msra.mxu0 %v671
        %707 = vmatmul.f32.gmra.mxu0 %v669
        %v708 = vpop.f32.mrf.mxu0
        %v709 = vadd.f32 %v689, %v708
        %710 = vmatmul.f32.gmra.mxu0 %v670
        %v711 = vpop.f32.mrf.mxu0
        %v712 = vadd.f32 %v689, %v711
        %713 = vdwg.mxu0
        %v714 = vmax.f32 %v709, 0.0
        %v715 = vmax.f32 %v712, 0.0
        %v716 = vld [vmem:[%s10] sm:$0xff]
        %v717 = vld [vmem:[%s10 + $0x8] sm:$0xff]
        %v718 = vld [vmem:[%s10 + $0x10] sm:$0xff]
        %v719 = vld [vmem:[%s10 + $0x18] sm:$0xff]
        %v720 = vld [vmem:[%s10 + $0x20] sm:$0xff]
        %v721 = vld [vmem:[%s10 + $0x28] sm:$0xff]
        %v722 = vld [vmem:[%s10 + $0x30] sm:$0xff]
        %v723 = vld [vmem:[%s10 + $0x38] sm:$0xff]
        %v724 = vld [vmem:[%s11] sm:$0x1]
        %v726 = vperm.slane %v724, 0
        %vm728 = vcmask 523264
        %v730 = vsel %vm728, %v714, 0
        %v733 = vsel %vm728, %v715, 0
        %735 = vmatpush.msra.mxu0 0.0
        %736 = vmatpush.msra.mxu0 0.0
        %737 = vmatpush.msra.mxu0 0.0
        %738 = vmatpush.msra.mxu0 0.0
        %739 = vmatpush.msra.mxu0 0.0
        %740 = vmatpush.msra.mxu0 0.0
        %741 = vmatpush.msra.mxu0 0.0
        %742 = vmatpush.msra.mxu0 0.0
        %743 = vmatpush.msra.mxu0 %v723
        %744 = vmatpush.msra.mxu0 %v722
        %745 = vmatpush.msra.mxu0 %v721
        %746 = vmatpush.msra.mxu0 %v720
        %747 = vmatpush.msra.mxu0 %v719
        %748 = vmatpush.msra.mxu0 %v718
        %749 = vmatpush.msra.mxu0 %v717
        %750 = vmatpush.msra.mxu0 %v716
        %751 = vmatmul.f32.gmra.mxu0 %v730
        %v752 = vpop.f32.mrf.mxu0
        %v753 = vadd.f32 %v726, %v752
        %754 = vmatmul.f32.gmra.mxu0 %v733
        %v755 = vpop.f32.mrf.mxu0
        %v756 = vadd.f32 %v726, %v755
        %757 = vdwg.mxu0
        %v758 = vmax.f32 %v753, 0.0
        %v759 = vmax.f32 %v756, 0.0
        %vm760 = vcmask 261120
        %761 = vst.msk [vmem:[%s455] sm:$0xff] %vm760, %v758
        %762 = vst.msk [vmem:[%s455 + $0x8] sm:$0xff] %vm760, %v759
        %s763 = sand.u32 %s306, 1
        %s764 = scalar_lea.sflag [#allocation3], %s763
        %s765 = sand.u32 %s306, 1
        %s766 = smul.addr %s765, 16
        %s767 = scalar_lea.vmem [#allocation2], %s766
        // Predicated region
        $region69: #{tpu_custom_call.1} parent=67 // pred_check
          %p768 = pneg %p316
        $region70: #{tpu_custom_call.1} parent=67 // pred_check_branch
          %770 = sbr.rel (%p768) target = $region72
        $region71: #{tpu_custom_call.1} parent=67 // pred_region
          %s771 = smul.u32 2, %s26
          %773 = vsyncadd %s764, 0
          %s774 = smul.addr %s771, 8
          %s775 = scalar_lea.hbm %s12, %s774
          %s776 = sshll.u32 %s767, 4
          %s777 = int_to_ptr.vmem [resolvable:$true] %s776
          %s778 = sshll.u32 %s775, 4
          %s779 = int_to_ptr.hbm [resolvable:$true] %s778
          %784 = dma.vmem_to_hbm [thread:$0]  %s777, 256, %s779, %s764, 128, 128, 8
        $region72: #{tpu_custom_call.1} parent=67 // pred_fallthru
          _
      $region68: #{tpu_custom_call.1} parent=5 // pred_fallthru
        _
      %p785 = scmp.le.s32.totalorder 2, %s21
      // Predicated region
      $region73: #{tpu_custom_call.1} parent=5 // pred_check
        %p786 = pneg %p785
      $region74: #{tpu_custom_call.1} parent=5 // pred_check_branch
        %788 = sbr.rel (%p786) target = $region76
      $region75: #{tpu_custom_call.1} parent=5 // pred_region
        %s789 = ssub.s32 %s21, 2
        // Predicated region
        $region77: #{tpu_custom_call.1} parent=75 // pred_check
          %p790 = pneg %p322
        $region78: #{tpu_custom_call.1} parent=75 // pred_check_branch
          %792 = sbr.rel (%p790) target = $region80
        $region79: #{tpu_custom_call.1} parent=75 // pred_region
          %s793 = sand.u32 %s307, 1
          %s794 = scalar_lea.sflag [#allocation3], %s793
          %s795 = sand.u32 %s307, 1
          %s796 = smul.addr %s795, 16
          %s797 = scalar_lea.vmem [#allocation2], %s796
          %799 = dma.done %s794, 256
        $region80: #{tpu_custom_call.1} parent=75 // pred_fallthru
          _
      $region76: #{tpu_custom_call.1} parent=5 // pred_fallthru
        _
    $region6: #{tpu_custom_call.1} parent=1 // loop_footer
      %s25 = sadd.s32 1, %s21
    $region7: #{tpu_custom_call.1} parent=1 // loop_footer_branch
      %20 = sbr.rel target = $region3
    $region8: #{tpu_custom_call.1} parent=1 // loop_exit
      _
    %800 = vsyncpa [#allocation3], 1
    %s801 = scalar_lea.sflag [#allocation3], 1
    %802 = vsyncpa %s801, 1

</llo_original>
